<compile_context>
chip_gen: v6e
topology: v6e:2x2x1
jax: 0.10.0
libtpu: 0.0.40
codegen_flags: <defaults>
</compile_context>

<pallas_src>
import functools

import jax
import jax.numpy as jnp
from jax.experimental import pallas as pl
from jax.experimental.pallas import tpu as pltpu

K = 7               # conv kernel size
PAD = 3             # reflection pad (K // 2)
_SUBLANE_ALIGN = 32  # row-group stride alignment (safe for f32/bf16 sublane tiling)


def _outconv_kernel(xg_ref, w_ref, b_ref, o_ref, p_ref, *, bb, h, w, cinkp):
    """im2col into VMEM scratch once, then a single MXU matmul + bias + tanh.

    xg_ref: (BB, CinKp, Hp*W)   width-tap-gathered, flattened padded input
    w_ref : (Cout, K*CinKp)     weights, rows ordered (kh, ci, kw) (+zero pad)
    b_ref : (Cout, 1)           bias (f32)
    o_ref : (BB, Cout, H*W)     output block (lane-dense last dim)
    p_ref : (K*CinKp, BB*H*W)   im2col scratch (MXU operand dtype)
    """
    hw = h * w

    # Build the patch matrix once.  The wrapper already gathered the kw taps,
    # so for each kh the patch rows are one contiguous lane window of the
    # flattened input: pure slice copies (aligned sublane/lane offsets),
    # no reshapes, no per-position relayouts, no tiny matmuls.
    for b in range(bb):
        xb = xg_ref[b]                                       # (CinKp, Hp*W)
        for kh in range(K):
            p_ref[kh * cinkp:(kh + 1) * cinkp, b * hw:(b + 1) * hw] = (
                xb[:, kh * w: kh * w + hw])

    # One big MXU matmul: K-dim = K*K*Cin (padded), N = BB*H*W (lane-dense),
    # f32 accumulation.
    acc = jnp.dot(w_ref[...], p_ref[...], preferred_element_type=jnp.float32)
    y = jnp.tanh(acc + b_ref[...])      # bias broadcast over lanes; tanh on EUP

    for b in range(bb):
        o_ref[b, :, :] = y[:, b * hw:(b + 1) * hw].astype(o_ref.dtype)


def outconv_forward(x_nchw, weight_oihw, bias, *, mxu_dtype=jnp.bfloat16,
                    batch_block=None):
    """ReflectionPad2d(3) -> Conv2d(k=7) -> Tanh.  x: (B,Cin,H,W) -> (B,Cout,H,W)."""
    B, Cin, H, W = x_nchw.shape
    Cout = weight_oihw.shape[0]
    Hp = H + 2 * PAD
    HW = H * W
    CinK = Cin * K
    CinKp = ((CinK + _SUBLANE_ALIGN - 1) // _SUBLANE_ALIGN) * _SUBLANE_ALIGN
    out_dtype = x_nchw.dtype

    # ---------- XLA-side layout plumbing (one fused pass over the input) ------
    # Stay in NCHW end-to-end: no NCHW<->NHWC transposes anywhere.
    xp = jnp.pad(x_nchw, ((0, 0), (0, 0), (PAD, PAD), (PAD, PAD)), mode="reflect")
    # Gather width taps:  xg[b, ci*K + kw, hp, w] = xp[b, ci, hp, w + kw]
    xg = jnp.stack([xp[:, :, :, kw:kw + W] for kw in range(K)], axis=2)
    xg = xg.reshape(B, CinK, Hp, W)
    xg = jnp.pad(xg, ((0, 0), (0, CinKp - CinK), (0, 0), (0, 0)))   # zero rows
    xg = xg.astype(mxu_dtype).reshape(B, CinKp, Hp * W)
    # Weights -> (Cout, K*CinKp), rows ordered (kh, ci, kw), zeros in pad rows.
    w2 = jnp.transpose(weight_oihw, (0, 2, 1, 3)).reshape(Cout, K, CinK)
    w2 = jnp.pad(w2, ((0, 0), (0, 0), (0, CinKp - CinK)))
    w2 = w2.reshape(Cout, K * CinKp).astype(mxu_dtype)
    b2 = bias.reshape(Cout, 1).astype(jnp.float32)

    # ---------- how many images share one grid step (fold batch into N) -------
    mxu_bytes = jnp.dtype(mxu_dtype).itemsize
    out_bytes = jnp.dtype(out_dtype).itemsize
    per_image = (CinKp * Hp * W * mxu_bytes          # input block
                 + Cout * HW * out_bytes             # output block
                 + K * CinKp * HW * mxu_bytes)       # im2col scratch
    if batch_block is None:
        budget = 6 * 2**20     # headroom for double-buffering + weights
        batch_block = B
        while batch_block > 1 and (per_image * batch_block > budget
                                   or B % batch_block != 0):
            batch_block -= 1
    assert B % batch_block == 0, (B, batch_block)
    BB = batch_block
    # TODO(synk): for large images (e.g. 256x256 with many channels on v7x's
    # 64 MiB VMEM) add an H-tile grid axis with a (K-1)-row halo instead of
    # whole-image blocks; that also feeds both v7x TensorCores when B is small.

    need = (2 * (BB * CinKp * Hp * W * mxu_bytes + BB * Cout * HW * out_bytes)
            + 2 * (Cout * K * CinKp * mxu_bytes + Cout * 4)
            + K * CinKp * BB * HW * mxu_bytes)
    vmem_limit = int(min(48 * 2**20, max(16 * 2**20, 2 * need)))

    kernel = functools.partial(_outconv_kernel, bb=BB, h=H, w=W, cinkp=CinKp)

    out = pl.pallas_call(
        kernel,
        out_shape=jax.ShapeDtypeStruct((B, Cout, HW), out_dtype),
        grid_spec=pltpu.PrefetchScalarGridSpec(
            num_scalar_prefetch=0,
            grid=(B // BB,),
            in_specs=[
                pl.BlockSpec((BB, CinKp, Hp * W), lambda i: (i, 0, 0)),
                pl.BlockSpec((Cout, K * CinKp), lambda i: (0, 0)),
                pl.BlockSpec((Cout, 1), lambda i: (0, 0)),
            ],
            out_specs=pl.BlockSpec((BB, Cout, HW), lambda i: (i, 0, 0)),
            scratch_shapes=[pltpu.VMEM((K * CinKp, BB * HW), mxu_dtype)],
        ),
        compiler_params=pltpu.CompilerParams(
            dimension_semantics=("parallel",),
            vmem_limit_bytes=vmem_limit),
    )(xg, w2, b2)

    # Free trailing reshape back to PyTorch NCHW (no transpose, no extra pass).
    return out.reshape(B, Cout, H, W)


def init_outconv_params(key, in_ch, out_ch):
    """Deterministic init mimicking PyTorch Conv2d default (uniform +-1/sqrt(fan_in))."""
    kw_key, b_key = jax.random.split(key)
    fan_in = in_ch * K * K
    bound = 1.0 / (fan_in ** 0.5)
    weight = jax.random.uniform(kw_key, (out_ch, in_ch, K, K),
                                minval=-bound, maxval=bound, dtype=jnp.float32)
    bias = jax.random.uniform(b_key, (out_ch,),
                              minval=-bound, maxval=bound, dtype=jnp.float32)
    return weight, bias


def _reference(x_nchw, weight_oihw, bias):
    # Pure-JAX reference (reflection pad + valid 7x7 conv + tanh), NCHW.
    xp = jnp.pad(x_nchw, ((0, 0), (0, 0), (PAD, PAD), (PAD, PAD)), mode="reflect")
    y = jax.lax.conv_general_dilated(
        xp, weight_oihw, window_strides=(1, 1), padding="VALID",
        dimension_numbers=("NCHW", "OIHW", "NCHW"),
        precision=jax.lax.Precision.HIGHEST)
    return jnp.tanh(y + bias[None, :, None, None])


if __name__ == "__main__":
    key = jax.random.PRNGKey(0)
    x_key, p_key = jax.random.split(key)

    B, in_ch, out_ch, H, W = 2, 4, 3, 16, 16
    x = jax.random.normal(x_key, (B, in_ch, H, W), dtype=jnp.float32)
    weight, bias = init_outconv_params(p_key, in_ch, out_ch)

    ref = _reference(x, weight, bias)

    # Default fast path: bf16 MXU operands, f32 accumulation.
    out = jax.block_until_ready(outconv_forward(x, weight, bias))
    assert out.shape == (B, out_ch, H, W), out.shape
    assert jnp.allclose(out, ref, atol=3e-2, rtol=3e-2), "bf16 path mismatch vs reference"

    # f32 path for tight numerical validation.
    out_f32 = jax.block_until_ready(
        outconv_forward(x, weight, bias, mxu_dtype=jnp.float32))
    assert jnp.allclose(out_f32, ref, atol=1e-4, rtol=1e-4), "f32 path mismatch vs reference"

    print("KERNEL_OK")
</pallas_src>

<mosaic_0001>
module attributes {stable_mosaic.version = 11 : i64} {
  func.func @_outconv_kernel(%arg0: i32, %arg1: memref<2x32x352xbf16, #tpu.memory_space<vmem>>, %arg2: memref<3x224xbf16, #tpu.memory_space<vmem>>, %arg3: memref<3x1xf32, #tpu.memory_space<vmem>>, %arg4: memref<2x3x256xf32, #tpu.memory_space<vmem>>, %arg5: memref<224x512xbf16, #tpu.memory_space<vmem>>) attributes {dimension_semantics = [#tpu.dimension_semantics<parallel>], iteration_bounds = array<i64: 1>, scalar_prefetch = 0 : i64, scratch_operands = 1 : i64, tpu.core_type = #tpu.core_type<tc>, window_params = [{transform_indices = @transform_0, window_bounds = array<i64: 2, 32, 352>}, {pipeline_mode = #tpu.pipeline_mode<synchronous>, transform_indices = @transform_1, window_bounds = array<i64: 3, 224>}, {pipeline_mode = #tpu.pipeline_mode<synchronous>, transform_indices = @transform_2, window_bounds = array<i64: 3, 1>}, {transform_indices = @transform_3, window_bounds = array<i64: 2, 3, 256>}]} {
    %c0 = arith.constant 0 : index
    %c0_0 = arith.constant 0 : index
    %c0_1 = arith.constant 0 : index
    %0 = vector.load %arg1[%c0, %c0_0, %c0_1] : memref<2x32x352xbf16, #tpu.memory_space<vmem>>, vector<1x32x352xbf16>
    %1 = vector.shape_cast %0 : vector<1x32x352xbf16> to vector<32x352xbf16>
    %2 = vector.extract_strided_slice %1 {offsets = [0, 0], sizes = [32, 256], strides = [1, 1]} : vector<32x352xbf16> to vector<32x256xbf16>
    %c0_2 = arith.constant 0 : index
    %c0_3 = arith.constant 0 : index
    %3 = vector.load %arg5[%c0_2, %c0_3] : memref<224x512xbf16, #tpu.memory_space<vmem>>, vector<32x256xbf16>
    tpu.vector_store %arg5[%c0_2, %c0_3], %2 {strides = array<i32>} : memref<224x512xbf16, #tpu.memory_space<vmem>>, vector<32x256xbf16>,
    %4 = vector.extract_strided_slice %1 {offsets = [0, 16], sizes = [32, 256], strides = [1, 1]} : vector<32x352xbf16> to vector<32x256xbf16>
    %c32 = arith.constant 32 : index
    %c0_4 = arith.constant 0 : index
    %5 = vector.load %arg5[%c32, %c0_4] : memref<224x512xbf16, #tpu.memory_space<vmem>>, vector<32x256xbf16>
    tpu.vector_store %arg5[%c32, %c0_4], %4 {strides = array<i32>} : memref<224x512xbf16, #tpu.memory_space<vmem>>, vector<32x256xbf16>,
    %6 = vector.extract_strided_slice %1 {offsets = [0, 32], sizes = [32, 256], strides = [1, 1]} : vector<32x352xbf16> to vector<32x256xbf16>
    %c64 = arith.constant 64 : index
    %c0_5 = arith.constant 0 : index
    %7 = vector.load %arg5[%c64, %c0_5] : memref<224x512xbf16, #tpu.memory_space<vmem>>, vector<32x256xbf16>
    tpu.vector_store %arg5[%c64, %c0_5], %6 {strides = array<i32>} : memref<224x512xbf16, #tpu.memory_space<vmem>>, vector<32x256xbf16>,
    %8 = vector.extract_strided_slice %1 {offsets = [0, 48], sizes = [32, 256], strides = [1, 1]} : vector<32x352xbf16> to vector<32x256xbf16>
    %c96 = arith.constant 96 : index
    %c0_6 = arith.constant 0 : index
    %9 = vector.load %arg5[%c96, %c0_6] : memref<224x512xbf16, #tpu.memory_space<vmem>>, vector<32x256xbf16>
    tpu.vector_store %arg5[%c96, %c0_6], %8 {strides = array<i32>} : memref<224x512xbf16, #tpu.memory_space<vmem>>, vector<32x256xbf16>,
    %10 = vector.extract_strided_slice %1 {offsets = [0, 64], sizes = [32, 256], strides = [1, 1]} : vector<32x352xbf16> to vector<32x256xbf16>
    %c128 = arith.constant 128 : index
    %c0_7 = arith.constant 0 : index
    %11 = vector.load %arg5[%c128, %c0_7] : memref<224x512xbf16, #tpu.memory_space<vmem>>, vector<32x256xbf16>
    tpu.vector_store %arg5[%c128, %c0_7], %10 {strides = array<i32>} : memref<224x512xbf16, #tpu.memory_space<vmem>>, vector<32x256xbf16>,
    %12 = vector.extract_strided_slice %1 {offsets = [0, 80], sizes = [32, 256], strides = [1, 1]} : vector<32x352xbf16> to vector<32x256xbf16>
    %c160 = arith.constant 160 : index
    %c0_8 = arith.constant 0 : index
    %13 = vector.load %arg5[%c160, %c0_8] : memref<224x512xbf16, #tpu.memory_space<vmem>>, vector<32x256xbf16>
    tpu.vector_store %arg5[%c160, %c0_8], %12 {strides = array<i32>} : memref<224x512xbf16, #tpu.memory_space<vmem>>, vector<32x256xbf16>,
    %14 = vector.extract_strided_slice %1 {offsets = [0, 96], sizes = [32, 256], strides = [1, 1]} : vector<32x352xbf16> to vector<32x256xbf16>
    %c192 = arith.constant 192 : index
    %c0_9 = arith.constant 0 : index
    %15 = vector.load %arg5[%c192, %c0_9] : memref<224x512xbf16, #tpu.memory_space<vmem>>, vector<32x256xbf16>
    tpu.vector_store %arg5[%c192, %c0_9], %14 {strides = array<i32>} : memref<224x512xbf16, #tpu.memory_space<vmem>>, vector<32x256xbf16>,
    %c1 = arith.constant 1 : index
    %c0_10 = arith.constant 0 : index
    %c0_11 = arith.constant 0 : index
    %16 = vector.load %arg1[%c1, %c0_10, %c0_11] : memref<2x32x352xbf16, #tpu.memory_space<vmem>>, vector<1x32x352xbf16>
    %17 = vector.shape_cast %16 : vector<1x32x352xbf16> to vector<32x352xbf16>
    %18 = vector.extract_strided_slice %17 {offsets = [0, 0], sizes = [32, 256], strides = [1, 1]} : vector<32x352xbf16> to vector<32x256xbf16>
    %c0_12 = arith.constant 0 : index
    %c256 = arith.constant 256 : index
    %19 = vector.load %arg5[%c0_12, %c256] : memref<224x512xbf16, #tpu.memory_space<vmem>>, vector<32x256xbf16>
    tpu.vector_store %arg5[%c0_12, %c256], %18 {strides = array<i32>} : memref<224x512xbf16, #tpu.memory_space<vmem>>, vector<32x256xbf16>,
    %20 = vector.extract_strided_slice %17 {offsets = [0, 16], sizes = [32, 256], strides = [1, 1]} : vector<32x352xbf16> to vector<32x256xbf16>
    %c32_13 = arith.constant 32 : index
    %c256_14 = arith.constant 256 : index
    %21 = vector.load %arg5[%c32_13, %c256_14] : memref<224x512xbf16, #tpu.memory_space<vmem>>, vector<32x256xbf16>
    tpu.vector_store %arg5[%c32_13, %c256_14], %20 {strides = array<i32>} : memref<224x512xbf16, #tpu.memory_space<vmem>>, vector<32x256xbf16>,
    %22 = vector.extract_strided_slice %17 {offsets = [0, 32], sizes = [32, 256], strides = [1, 1]} : vector<32x352xbf16> to vector<32x256xbf16>
    %c64_15 = arith.constant 64 : index
    %c256_16 = arith.constant 256 : index
    %23 = vector.load %arg5[%c64_15, %c256_16] : memref<224x512xbf16, #tpu.memory_space<vmem>>, vector<32x256xbf16>
    tpu.vector_store %arg5[%c64_15, %c256_16], %22 {strides = array<i32>} : memref<224x512xbf16, #tpu.memory_space<vmem>>, vector<32x256xbf16>,
    %24 = vector.extract_strided_slice %17 {offsets = [0, 48], sizes = [32, 256], strides = [1, 1]} : vector<32x352xbf16> to vector<32x256xbf16>
    %c96_17 = arith.constant 96 : index
    %c256_18 = arith.constant 256 : index
    %25 = vector.load %arg5[%c96_17, %c256_18] : memref<224x512xbf16, #tpu.memory_space<vmem>>, vector<32x256xbf16>
    tpu.vector_store %arg5[%c96_17, %c256_18], %24 {strides = array<i32>} : memref<224x512xbf16, #tpu.memory_space<vmem>>, vector<32x256xbf16>,
    %26 = vector.extract_strided_slice %17 {offsets = [0, 64], sizes = [32, 256], strides = [1, 1]} : vector<32x352xbf16> to vector<32x256xbf16>
    %c128_19 = arith.constant 128 : index
    %c256_20 = arith.constant 256 : index
    %27 = vector.load %arg5[%c128_19, %c256_20] : memref<224x512xbf16, #tpu.memory_space<vmem>>, vector<32x256xbf16>
    tpu.vector_store %arg5[%c128_19, %c256_20], %26 {strides = array<i32>} : memref<224x512xbf16, #tpu.memory_space<vmem>>, vector<32x256xbf16>,
    %28 = vector.extract_strided_slice %17 {offsets = [0, 80], sizes = [32, 256], strides = [1, 1]} : vector<32x352xbf16> to vector<32x256xbf16>
    %c160_21 = arith.constant 160 : index
    %c256_22 = arith.constant 256 : index
    %29 = vector.load %arg5[%c160_21, %c256_22] : memref<224x512xbf16, #tpu.memory_space<vmem>>, vector<32x256xbf16>
    tpu.vector_store %arg5[%c160_21, %c256_22], %28 {strides = array<i32>} : memref<224x512xbf16, #tpu.memory_space<vmem>>, vector<32x256xbf16>,
    %30 = vector.extract_strided_slice %17 {offsets = [0, 96], sizes = [32, 256], strides = [1, 1]} : vector<32x352xbf16> to vector<32x256xbf16>
    %c192_23 = arith.constant 192 : index
    %c256_24 = arith.constant 256 : index
    %31 = vector.load %arg5[%c192_23, %c256_24] : memref<224x512xbf16, #tpu.memory_space<vmem>>, vector<32x256xbf16>
    tpu.vector_store %arg5[%c192_23, %c256_24], %30 {strides = array<i32>} : memref<224x512xbf16, #tpu.memory_space<vmem>>, vector<32x256xbf16>,
    %c0_25 = arith.constant 0 : index
    %c0_26 = arith.constant 0 : index
    %32 = vector.load %arg2[%c0_25, %c0_26] : memref<3x224xbf16, #tpu.memory_space<vmem>>, vector<3x224xbf16>
    %c0_27 = arith.constant 0 : index
    %c0_28 = arith.constant 0 : index
    %33 = vector.load %arg5[%c0_27, %c0_28] : memref<224x512xbf16, #tpu.memory_space<vmem>>, vector<224x512xbf16>
    %cst = arith.constant dense<0.000000e+00> : vector<3x512xf32>
    %34 = tpu.matmul %32, %33, %cst {dimension_numbers = #tpu.dot_dimension_numbers<[1], [0], [0], [1], [0, 0, 1, 1], [], []>} : vector<3x224xbf16>, vector<224x512xbf16>, vector<3x512xf32> -> vector<3x512xf32>
    %c0_29 = arith.constant 0 : index
    %c0_30 = arith.constant 0 : index
    %35 = vector.load %arg3[%c0_29, %c0_30] : memref<3x1xf32, #tpu.memory_space<vmem>>, vector<3x1xf32>
    %36 = vector.broadcast %35 : vector<3x1xf32> to vector<3x512xf32>
    %37 = arith.addf %34, %36 : vector<3x512xf32>
    %38 = math.tanh %37 : vector<3x512xf32>
    %39 = vector.extract_strided_slice %38 {offsets = [0, 0], sizes = [3, 256], strides = [1, 1]} : vector<3x512xf32> to vector<3x256xf32>
    %c0_31 = arith.constant 0 : index
    %c0_32 = arith.constant 0 : index
    %c0_33 = arith.constant 0 : index
    %40 = vector.load %arg4[%c0_31, %c0_32, %c0_33] : memref<2x3x256xf32, #tpu.memory_space<vmem>>, vector<1x3x256xf32>
    %41 = vector.shape_cast %40 : vector<1x3x256xf32> to vector<3x256xf32>
    %42 = vector.shape_cast %39 : vector<3x256xf32> to vector<1x3x256xf32>
    tpu.vector_store %arg4[%c0_31, %c0_32, %c0_33], %42 {strides = array<i32>} : memref<2x3x256xf32, #tpu.memory_space<vmem>>, vector<1x3x256xf32>,
    %43 = vector.extract_strided_slice %38 {offsets = [0, 256], sizes = [3, 256], strides = [1, 1]} : vector<3x512xf32> to vector<3x256xf32>
    %c1_34 = arith.constant 1 : index
    %c0_35 = arith.constant 0 : index
    %c0_36 = arith.constant 0 : index
    %44 = vector.load %arg4[%c1_34, %c0_35, %c0_36] : memref<2x3x256xf32, #tpu.memory_space<vmem>>, vector<1x3x256xf32>
    %45 = vector.shape_cast %44 : vector<1x3x256xf32> to vector<3x256xf32>
    %46 = vector.shape_cast %43 : vector<3x256xf32> to vector<1x3x256xf32>
    tpu.vector_store %arg4[%c1_34, %c0_35, %c0_36], %46 {strides = array<i32>} : memref<2x3x256xf32, #tpu.memory_space<vmem>>, vector<1x3x256xf32>,
    return
  }
  func.func @transform_0(%arg0: i32) -> (i32, i32, i32) {
    %c0_i32 = arith.constant 0 : i32
    %c0_i32_0 = arith.constant 0 : i32
    %c0_i32_1 = arith.constant 0 : i32
    return %arg0, %c0_i32, %c0_i32_0 : i32, i32, i32
  }
  func.func @transform_1(%arg0: i32) -> (i32, i32) {
    %c0_i32 = arith.constant 0 : i32
    %c0_i32_0 = arith.constant 0 : i32
    %c0_i32_1 = arith.constant 0 : i32
    return %c0_i32, %c0_i32_0 : i32, i32
  }
  func.func @transform_2(%arg0: i32) -> (i32, i32) {
    %c0_i32 = arith.constant 0 : i32
    %c0_i32_0 = arith.constant 0 : i32
    %c0_i32_1 = arith.constant 0 : i32
    return %c0_i32, %c0_i32_0 : i32, i32
  }
  func.func @transform_3(%arg0: i32) -> (i32, i32, i32) {
    %c0_i32 = arith.constant 0 : i32
    %c0_i32_0 = arith.constant 0 : i32
    %c0_i32_1 = arith.constant 0 : i32
    return %arg0, %c0_i32, %c0_i32_0 : i32, i32, i32
  }
}

</mosaic_0001>

<llo_original>
// kernel: tpu_custom_call.1
$region0: #{tpu_custom_call.1}
  #allocation0 [shape = 'u32[]', space=smem, size = 0x4, offset = 0x4, fixed_abs, tag = 'smem constant byte address 0x4 - core index']
  #allocation1 [shape = 'u32[144,128]{1,0:T(1,128)}', space=vmem, size = 0x12000, scoped, tag = 'internal scratch']
  #allocation2 [shape = 'bf16[224,512]{1,0:T(8,128)(2,1)}', space=vmem, size = 0x38000, scoped, tag = 'scratch operand']
  %s0 = inlined_call_operand.hbm [shape: bf16[2,32,352], index: 0, kind: input, shape index: {}]
  %s1 = inlined_call_operand.vmem [shape: bf16[3,224], index: 1, kind: input, shape index: {}]
  %s2 = inlined_call_operand.vmem [shape: f32[3,1], index: 2, kind: input, shape index: {}]
  %s3 = inlined_call_operand.vmem [shape: f32[2,3,256], index: 3, kind: output, shape index: {}]
  %s4 = sld [smem:[#allocation0]]
  $region26: #{tpu_custom_call.1} parent=0
    _
  %s6 = ssub.s32 1, %s4
  %s7 = scalar_select 0, %s6, %s4
  $region1: #{tpu_custom_call.1} parent=0
    #allocation3 [shape = 'u8[49152]{0}', space=vmem, size = 0xc000, scoped, tag = 'input window, operand 0, single buffered']
    #allocation4 [shape = 's32[1]{0}', space=sflag, size = 0x4, scoped, tag = 'scoped memory for tpu_custom_call.1']
    %8 = vsyncpa [#allocation4], 0
    // Predicated region
    $region2: #{tpu_custom_call.1} parent=1 // pred_check
      _
    $region3: #{tpu_custom_call.1} parent=1 // pred_check_branch
      %10 = sbr.rel (0) target = $region5
    $region4: #{tpu_custom_call.1} parent=1 // pred_region
      %s12 = ssub.s32 1536, 1536
      %13 = vsyncadd [#allocation4], %s12
      %s14 = sshll.u32 [#allocation3], 4
      %s15 = int_to_ptr.vmem [resolvable:$true] %s14
      %20 = dma.hbm_to_vmem [thread:$0]  %s0, 1536, %s15, [#allocation4], 192, 192, 12
    $region5: #{tpu_custom_call.1} parent=1 // pred_fallthru
      _
    // Predicated region
    $region6: #{tpu_custom_call.1} parent=1 // pred_check
      _
    $region7: #{tpu_custom_call.1} parent=1 // pred_check_branch
      %22 = sbr.rel (0) target = $region9
    $region8: #{tpu_custom_call.1} parent=1 // pred_region
      _
    $region9: #{tpu_custom_call.1} parent=1 // pred_fallthru
      _
    // Predicated region
    $region10: #{tpu_custom_call.1} parent=1 // pred_check
      _
    $region11: #{tpu_custom_call.1} parent=1 // pred_check_branch
      %24 = sbr.rel (0) target = $region13
    $region12: #{tpu_custom_call.1} parent=1 // pred_region
      _
    $region13: #{tpu_custom_call.1} parent=1 // pred_fallthru
      _
    // Predicated region
    $region14: #{tpu_custom_call.1} parent=1 // pred_check
      _
    $region15: #{tpu_custom_call.1} parent=1 // pred_check_branch
      %26 = sbr.rel (0) target = $region17
    $region16: #{tpu_custom_call.1} parent=1 // pred_region
      %27 = dma.done [#allocation4], 1536
    $region17: #{tpu_custom_call.1} parent=1 // pred_fallthru
      _
    %v29 = vld [vmem:[#allocation3] sm:$0xff]
    %v30 = vld [vmem:[#allocation3 + $0x8] sm:$0xf]
    %v31 = vld [vmem:[#allocation3 + $0xc] sm:$0xff]
    %v32 = vld [vmem:[#allocation3 + $0x14] sm:$0xf]
    %v33 = vld [vmem:[#allocation3 + $0x18] sm:$0xff]
    %v34 = vld [vmem:[#allocation3 + $0x20] sm:$0xf]
    %v35 = vld [vmem:[#allocation3 + $0x24] sm:$0xff]
    %v36 = vld [vmem:[#allocation3 + $0x2c] sm:$0xf]
    %37 = vst [vmem:[#allocation2] sm:$0xff] %v29
    %38 = vst [vmem:[#allocation2 + $0x10] sm:$0xff] %v31
    %39 = vst [vmem:[#allocation2 + $0x20] sm:$0xff] %v33
    %40 = vst [vmem:[#allocation2 + $0x30] sm:$0xff] %v35
    %49 = vrot.lane.b32.xlu0 %v29, 112
    %v50 = vpop.permute.xlu0 %49
    %51 = vrot.lane.b32.xlu0 %v30, 112
    %v52 = vpop.permute.xlu0 %51
    %53 = vrot.lane.b32.xlu0 %v31, 112
    %v54 = vpop.permute.xlu0 %53
    %55 = vrot.lane.b32.xlu0 %v32, 112
    %v56 = vpop.permute.xlu0 %55
    %57 = vrot.lane.b32.xlu0 %v33, 112
    %v58 = vpop.permute.xlu0 %57
    %59 = vrot.lane.b32.xlu0 %v34, 112
    %v60 = vpop.permute.xlu0 %59
    %61 = vrot.lane.b32.xlu0 %v35, 112
    %v62 = vpop.permute.xlu0 %61
    %63 = vrot.lane.b32.xlu0 %v36, 112
    %v64 = vpop.permute.xlu0 %63
    %v65 = vrot.slane %v50, 4
    %v66 = vrot.slane %v52, 4
    %v67 = vrot.slane %v54, 4
    %v68 = vrot.slane %v56, 4
    %v69 = vrot.slane %v58, 4
    %v70 = vrot.slane %v60, 4
    %v71 = vrot.slane %v62, 4
    %v72 = vrot.slane %v64, 4
    %vm73 = vcmask 1043456
    %v74 = vsel %vm73, %v65, %v66
    %vm75 = vcmask 916480
    %v76 = vsel %vm75, %v50, %v74
    %v77 = vsel %vm73, %v67, %v68
    %v78 = vsel %vm75, %v54, %v77
    %v79 = vsel %vm73, %v69, %v70
    %v80 = vsel %vm75, %v58, %v79
    %v81 = vsel %vm73, %v71, %v72
    %v82 = vsel %vm75, %v62, %v81
    %87 = vst [vmem:[#allocation2 + $0x40] sm:$0xff] %v76
    %88 = vst [vmem:[#allocation2 + $0x50] sm:$0xff] %v78
    %89 = vst [vmem:[#allocation2 + $0x60] sm:$0xff] %v80
    %90 = vst [vmem:[#allocation2 + $0x70] sm:$0xff] %v82
    %91 = vrot.lane.b32.xlu0 %v29, 96
    %v92 = vpop.permute.xlu0 %91
    %93 = vrot.lane.b32.xlu0 %v30, 96
    %v94 = vpop.permute.xlu0 %93
    %95 = vrot.lane.b32.xlu0 %v31, 96
    %v96 = vpop.permute.xlu0 %95
    %97 = vrot.lane.b32.xlu0 %v32, 96
    %v98 = vpop.permute.xlu0 %97
    %99 = vrot.lane.b32.xlu0 %v33, 96
    %v100 = vpop.permute.xlu0 %99
    %101 = vrot.lane.b32.xlu0 %v34, 96
    %v102 = vpop.permute.xlu0 %101
    %103 = vrot.lane.b32.xlu0 %v35, 96
    %v104 = vpop.permute.xlu0 %103
    %105 = vrot.lane.b32.xlu0 %v36, 96
    %v106 = vpop.permute.xlu0 %105
    %v107 = vrot.slane %v92, 4
    %v108 = vrot.slane %v94, 4
    %v109 = vrot.slane %v96, 4
    %v110 = vrot.slane %v98, 4
    %v111 = vrot.slane %v100, 4
    %v112 = vrot.slane %v102, 4
    %v113 = vrot.slane %v104, 4
    %v114 = vrot.slane %v106, 4
    %v115 = vsel %vm73, %v107, %v108
    %vm116 = vcmask 785408
    %v117 = vsel %vm116, %v92, %v115
    %v118 = vsel %vm73, %v109, %v110
    %v119 = vsel %vm116, %v96, %v118
    %v120 = vsel %vm73, %v111, %v112
    %v121 = vsel %vm116, %v100, %v120
    %v122 = vsel %vm73, %v113, %v114
    %v123 = vsel %vm116, %v104, %v122
    %128 = vst [vmem:[#allocation2 + $0x80] sm:$0xff] %v117
    %129 = vst [vmem:[#allocation2 + $0x90] sm:$0xff] %v119
    %130 = vst [vmem:[#allocation2 + $0xa0] sm:$0xff] %v121
    %131 = vst [vmem:[#allocation2 + $0xb0] sm:$0xff] %v123
    %132 = vrot.lane.b32.xlu0 %v29, 80
    %v133 = vpop.permute.xlu0 %132
    %134 = vrot.lane.b32.xlu0 %v30, 80
    %v135 = vpop.permute.xlu0 %134
    %136 = vrot.lane.b32.xlu0 %v31, 80
    %v137 = vpop.permute.xlu0 %136
    %138 = vrot.lane.b32.xlu0 %v32, 80
    %v139 = vpop.permute.xlu0 %138
    %140 = vrot.lane.b32.xlu0 %v33, 80
    %v141 = vpop.permute.xlu0 %140
    %142 = vrot.lane.b32.xlu0 %v34, 80
    %v143 = vpop.permute.xlu0 %142
    %144 = vrot.lane.b32.xlu0 %v35, 80
    %v145 = vpop.permute.xlu0 %144
    %146 = vrot.lane.b32.xlu0 %v36, 80
    %v147 = vpop.permute.xlu0 %146
    %v148 = vrot.slane %v133, 4
    %v149 = vrot.slane %v135, 4
    %v150 = vrot.slane %v137, 4
    %v151 = vrot.slane %v139, 4
    %v152 = vrot.slane %v141, 4
    %v153 = vrot.slane %v143, 4
    %v154 = vrot.slane %v145, 4
    %v155 = vrot.slane %v147, 4
    %v156 = vsel %vm73, %v148, %v149
    %vm157 = vcmask 654336
    %v158 = vsel %vm157, %v133, %v156
    %v159 = vsel %vm73, %v150, %v151
    %v160 = vsel %vm157, %v137, %v159
    %v161 = vsel %vm73, %v152, %v153
    %v162 = vsel %vm157, %v141, %v161
    %v163 = vsel %vm73, %v154, %v155
    %v164 = vsel %vm157, %v145, %v163
    %169 = vst [vmem:[#allocation2 + $0xc0] sm:$0xff] %v158
    %170 = vst [vmem:[#allocation2 + $0xd0] sm:$0xff] %v160
    %171 = vst [vmem:[#allocation2 + $0xe0] sm:$0xff] %v162
    %172 = vst [vmem:[#allocation2 + $0xf0] sm:$0xff] %v164
    %173 = vrot.lane.b32.xlu0 %v29, 64
    %v174 = vpop.permute.xlu0 %173
    %175 = vrot.lane.b32.xlu0 %v30, 64
    %v176 = vpop.permute.xlu0 %175
    %177 = vrot.lane.b32.xlu0 %v31, 64
    %v178 = vpop.permute.xlu0 %177
    %179 = vrot.lane.b32.xlu0 %v32, 64
    %v180 = vpop.permute.xlu0 %179
    %181 = vrot.lane.b32.xlu0 %v33, 64
    %v182 = vpop.permute.xlu0 %181
    %183 = vrot.lane.b32.xlu0 %v34, 64
    %v184 = vpop.permute.xlu0 %183
    %185 = vrot.lane.b32.xlu0 %v35, 64
    %v186 = vpop.permute.xlu0 %185
    %187 = vrot.lane.b32.xlu0 %v36, 64
    %v188 = vpop.permute.xlu0 %187
    %v189 = vrot.slane %v174, 4
    %v190 = vrot.slane %v176, 4
    %v191 = vrot.slane %v178, 4
    %v192 = vrot.slane %v180, 4
    %v193 = vrot.slane %v182, 4
    %v194 = vrot.slane %v184, 4
    %v195 = vrot.slane %v186, 4
    %v196 = vrot.slane %v188, 4
    %v197 = vsel %vm73, %v189, %v190
    %vm198 = vcmask 523264
    %v199 = vsel %vm198, %v174, %v197
    %v200 = vsel %vm73, %v191, %v192
    %v201 = vsel %vm198, %v178, %v200
    %v202 = vsel %vm73, %v193, %v194
    %v203 = vsel %vm198, %v182, %v202
    %v204 = vsel %vm73, %v195, %v196
    %v205 = vsel %vm198, %v186, %v204
    %210 = vst [vmem:[#allocation2 + $0x100] sm:$0xff] %v199
    %211 = vst [vmem:[#allocation2 + $0x110] sm:$0xff] %v201
    %212 = vst [vmem:[#allocation2 + $0x120] sm:$0xff] %v203
    %213 = vst [vmem:[#allocation2 + $0x130] sm:$0xff] %v205
    %214 = vrot.lane.b32.xlu0 %v29, 48
    %v215 = vpop.permute.xlu0 %214
    %216 = vrot.lane.b32.xlu0 %v30, 48
    %v217 = vpop.permute.xlu0 %216
    %218 = vrot.lane.b32.xlu0 %v31, 48
    %v219 = vpop.permute.xlu0 %218
    %220 = vrot.lane.b32.xlu0 %v32, 48
    %v221 = vpop.permute.xlu0 %220
    %222 = vrot.lane.b32.xlu0 %v33, 48
    %v223 = vpop.permute.xlu0 %222
    %224 = vrot.lane.b32.xlu0 %v34, 48
    %v225 = vpop.permute.xlu0 %224
    %226 = vrot.lane.b32.xlu0 %v35, 48
    %v227 = vpop.permute.xlu0 %226
    %228 = vrot.lane.b32.xlu0 %v36, 48
    %v229 = vpop.permute.xlu0 %228
    %v230 = vrot.slane %v215, 4
    %v231 = vrot.slane %v217, 4
    %v232 = vrot.slane %v219, 4
    %v233 = vrot.slane %v221, 4
    %v234 = vrot.slane %v223, 4
    %v235 = vrot.slane %v225, 4
    %v236 = vrot.slane %v227, 4
    %v237 = vrot.slane %v229, 4
    %v238 = vsel %vm73, %v230, %v231
    %vm239 = vcmask 392192
    %v240 = vsel %vm239, %v215, %v238
    %v241 = vsel %vm73, %v232, %v233
    %v242 = vsel %vm239, %v219, %v241
    %v243 = vsel %vm73, %v234, %v235
    %v244 = vsel %vm239, %v223, %v243
    %v245 = vsel %vm73, %v236, %v237
    %v246 = vsel %vm239, %v227, %v245
    %251 = vst [vmem:[#allocation2 + $0x140] sm:$0xff] %v240
    %252 = vst [vmem:[#allocation2 + $0x150] sm:$0xff] %v242
    %253 = vst [vmem:[#allocation2 + $0x160] sm:$0xff] %v244
    %254 = vst [vmem:[#allocation2 + $0x170] sm:$0xff] %v246
    %255 = vrot.lane.b32.xlu0 %v29, 32
    %v256 = vpop.permute.xlu0 %255
    %257 = vrot.lane.b32.xlu0 %v30, 32
    %v258 = vpop.permute.xlu0 %257
    %259 = vrot.lane.b32.xlu0 %v31, 32
    %v260 = vpop.permute.xlu0 %259
    %261 = vrot.lane.b32.xlu0 %v32, 32
    %v262 = vpop.permute.xlu0 %261
    %263 = vrot.lane.b32.xlu0 %v33, 32
    %v264 = vpop.permute.xlu0 %263
    %265 = vrot.lane.b32.xlu0 %v34, 32
    %v266 = vpop.permute.xlu0 %265
    %267 = vrot.lane.b32.xlu0 %v35, 32
    %v268 = vpop.permute.xlu0 %267
    %269 = vrot.lane.b32.xlu0 %v36, 32
    %v270 = vpop.permute.xlu0 %269
    %v271 = vrot.slane %v256, 4
    %v272 = vrot.slane %v258, 4
    %v273 = vrot.slane %v260, 4
    %v274 = vrot.slane %v262, 4
    %v275 = vrot.slane %v264, 4
    %v276 = vrot.slane %v266, 4
    %v277 = vrot.slane %v268, 4
    %v278 = vrot.slane %v270, 4
    %v279 = vsel %vm73, %v271, %v272
    %vm280 = vcmask 261120
    %v281 = vsel %vm280, %v256, %v279
    %v282 = vsel %vm73, %v273, %v274
    %v283 = vsel %vm280, %v260, %v282
    %v284 = vsel %vm73, %v275, %v276
    %v285 = vsel %vm280, %v264, %v284
    %v286 = vsel %vm73, %v277, %v278
    %v287 = vsel %vm280, %v268, %v286
    %292 = vst [vmem:[#allocation2 + $0x180] sm:$0xff] %v281
    %293 = vst [vmem:[#allocation2 + $0x190] sm:$0xff] %v283
    %294 = vst [vmem:[#allocation2 + $0x1a0] sm:$0xff] %v285
    %295 = vst [vmem:[#allocation2 + $0x1b0] sm:$0xff] %v287
    %s296 = scalar_lea.vmem [#allocation3], 48
    %v297 = vld [vmem:[%s296] sm:$0xff]
    %v298 = vld [vmem:[%s296 + $0x8] sm:$0xf]
    %v299 = vld [vmem:[%s296 + $0xc] sm:$0xff]
    %v300 = vld [vmem:[%s296 + $0x14] sm:$0xf]
    %v301 = vld [vmem:[%s296 + $0x18] sm:$0xff]
    %v302 = vld [vmem:[%s296 + $0x20] sm:$0xf]
    %v303 = vld [vmem:[%s296 + $0x24] sm:$0xff]
    %v304 = vld [vmem:[%s296 + $0x2c] sm:$0xf]
    %305 = vst [vmem:[#allocation2 + $0x8] sm:$0xff] %v297
    %306 = vst [vmem:[#allocation2 + $0x18] sm:$0xff] %v299
    %307 = vst [vmem:[#allocation2 + $0x28] sm:$0xff] %v301
    %308 = vst [vmem:[#allocation2 + $0x38] sm:$0xff] %v303
    %317 = vrot.lane.b32.xlu0 %v297, 112
    %v318 = vpop.permute.xlu0 %317
    %319 = vrot.lane.b32.xlu0 %v298, 112
    %v320 = vpop.permute.xlu0 %319
    %321 = vrot.lane.b32.xlu0 %v299, 112
    %v322 = vpop.permute.xlu0 %321
    %323 = vrot.lane.b32.xlu0 %v300, 112
    %v324 = vpop.permute.xlu0 %323
    %325 = vrot.lane.b32.xlu0 %v301, 112
    %v326 = vpop.permute.xlu0 %325
    %327 = vrot.lane.b32.xlu0 %v302, 112
    %v328 = vpop.permute.xlu0 %327
    %329 = vrot.lane.b32.xlu0 %v303, 112
    %v330 = vpop.permute.xlu0 %329
    %331 = vrot.lane.b32.xlu0 %v304, 112
    %v332 = vpop.permute.xlu0 %331
    %v333 = vrot.slane %v318, 4
    %v334 = vrot.slane %v320, 4
    %v335 = vrot.slane %v322, 4
    %v336 = vrot.slane %v324, 4
    %v337 = vrot.slane %v326, 4
    %v338 = vrot.slane %v328, 4
    %v339 = vrot.slane %v330, 4
    %v340 = vrot.slane %v332, 4
    %v341 = vsel %vm73, %v333, %v334
    %v342 = vsel %vm75, %v318, %v341
    %v343 = vsel %vm73, %v335, %v336
    %v344 = vsel %vm75, %v322, %v343
    %v345 = vsel %vm73, %v337, %v338
    %v346 = vsel %vm75, %v326, %v345
    %v347 = vsel %vm73, %v339, %v340
    %v348 = vsel %vm75, %v330, %v347
    %353 = vst [vmem:[#allocation2 + $0x48] sm:$0xff] %v342
    %354 = vst [vmem:[#allocation2 + $0x58] sm:$0xff] %v344
    %355 = vst [vmem:[#allocation2 + $0x68] sm:$0xff] %v346
    %356 = vst [vmem:[#allocation2 + $0x78] sm:$0xff] %v348
    %357 = vrot.lane.b32.xlu0 %v297, 96
    %v358 = vpop.permute.xlu0 %357
    %359 = vrot.lane.b32.xlu0 %v298, 96
    %v360 = vpop.permute.xlu0 %359
    %361 = vrot.lane.b32.xlu0 %v299, 96
    %v362 = vpop.permute.xlu0 %361
    %363 = vrot.lane.b32.xlu0 %v300, 96
    %v364 = vpop.permute.xlu0 %363
    %365 = vrot.lane.b32.xlu0 %v301, 96
    %v366 = vpop.permute.xlu0 %365
    %367 = vrot.lane.b32.xlu0 %v302, 96
    %v368 = vpop.permute.xlu0 %367
    %369 = vrot.lane.b32.xlu0 %v303, 96
    %v370 = vpop.permute.xlu0 %369
    %371 = vrot.lane.b32.xlu0 %v304, 96
    %v372 = vpop.permute.xlu0 %371
    %v373 = vrot.slane %v358, 4
    %v374 = vrot.slane %v360, 4
    %v375 = vrot.slane %v362, 4
    %v376 = vrot.slane %v364, 4
    %v377 = vrot.slane %v366, 4
    %v378 = vrot.slane %v368, 4
    %v379 = vrot.slane %v370, 4
    %v380 = vrot.slane %v372, 4
    %v381 = vsel %vm73, %v373, %v374
    %v382 = vsel %vm116, %v358, %v381
    %v383 = vsel %vm73, %v375, %v376
    %v384 = vsel %vm116, %v362, %v383
    %v385 = vsel %vm73, %v377, %v378
    %v386 = vsel %vm116, %v366, %v385
    %v387 = vsel %vm73, %v379, %v380
    %v388 = vsel %vm116, %v370, %v387
    %393 = vst [vmem:[#allocation2 + $0x88] sm:$0xff] %v382
    %394 = vst [vmem:[#allocation2 + $0x98] sm:$0xff] %v384
    %395 = vst [vmem:[#allocation2 + $0xa8] sm:$0xff] %v386
    %396 = vst [vmem:[#allocation2 + $0xb8] sm:$0xff] %v388
    %397 = vrot.lane.b32.xlu0 %v297, 80
    %v398 = vpop.permute.xlu0 %397
    %399 = vrot.lane.b32.xlu0 %v298, 80
    %v400 = vpop.permute.xlu0 %399
    %401 = vrot.lane.b32.xlu0 %v299, 80
    %v402 = vpop.permute.xlu0 %401
    %403 = vrot.lane.b32.xlu0 %v300, 80
    %v404 = vpop.permute.xlu0 %403
    %405 = vrot.lane.b32.xlu0 %v301, 80
    %v406 = vpop.permute.xlu0 %405
    %407 = vrot.lane.b32.xlu0 %v302, 80
    %v408 = vpop.permute.xlu0 %407
    %409 = vrot.lane.b32.xlu0 %v303, 80
    %v410 = vpop.permute.xlu0 %409
    %411 = vrot.lane.b32.xlu0 %v304, 80
    %v412 = vpop.permute.xlu0 %411
    %v413 = vrot.slane %v398, 4
    %v414 = vrot.slane %v400, 4
    %v415 = vrot.slane %v402, 4
    %v416 = vrot.slane %v404, 4
    %v417 = vrot.slane %v406, 4
    %v418 = vrot.slane %v408, 4
    %v419 = vrot.slane %v410, 4
    %v420 = vrot.slane %v412, 4
    %v421 = vsel %vm73, %v413, %v414
    %v422 = vsel %vm157, %v398, %v421
    %v423 = vsel %vm73, %v415, %v416
    %v424 = vsel %vm157, %v402, %v423
    %v425 = vsel %vm73, %v417, %v418
    %v426 = vsel %vm157, %v406, %v425
    %v427 = vsel %vm73, %v419, %v420
    %v428 = vsel %vm157, %v410, %v427
    %433 = vst [vmem:[#allocation2 + $0xc8] sm:$0xff] %v422
    %434 = vst [vmem:[#allocation2 + $0xd8] sm:$0xff] %v424
    %435 = vst [vmem:[#allocation2 + $0xe8] sm:$0xff] %v426
    %436 = vst [vmem:[#allocation2 + $0xf8] sm:$0xff] %v428
    %437 = vrot.lane.b32.xlu0 %v297, 64
    %v438 = vpop.permute.xlu0 %437
    %439 = vrot.lane.b32.xlu0 %v298, 64
    %v440 = vpop.permute.xlu0 %439
    %441 = vrot.lane.b32.xlu0 %v299, 64
    %v442 = vpop.permute.xlu0 %441
    %443 = vrot.lane.b32.xlu0 %v300, 64
    %v444 = vpop.permute.xlu0 %443
    %445 = vrot.lane.b32.xlu0 %v301, 64
    %v446 = vpop.permute.xlu0 %445
    %447 = vrot.lane.b32.xlu0 %v302, 64
    %v448 = vpop.permute.xlu0 %447
    %449 = vrot.lane.b32.xlu0 %v303, 64
    %v450 = vpop.permute.xlu0 %449
    %451 = vrot.lane.b32.xlu0 %v304, 64
    %v452 = vpop.permute.xlu0 %451
    %v453 = vrot.slane %v438, 4
    %v454 = vrot.slane %v440, 4
    %v455 = vrot.slane %v442, 4
    %v456 = vrot.slane %v444, 4
    %v457 = vrot.slane %v446, 4
    %v458 = vrot.slane %v448, 4
    %v459 = vrot.slane %v450, 4
    %v460 = vrot.slane %v452, 4
    %v461 = vsel %vm73, %v453, %v454
    %v462 = vsel %vm198, %v438, %v461
    %v463 = vsel %vm73, %v455, %v456
    %v464 = vsel %vm198, %v442, %v463
    %v465 = vsel %vm73, %v457, %v458
    %v466 = vsel %vm198, %v446, %v465
    %v467 = vsel %vm73, %v459, %v460
    %v468 = vsel %vm198, %v450, %v467
    %473 = vst [vmem:[#allocation2 + $0x108] sm:$0xff] %v462
    %474 = vst [vmem:[#allocation2 + $0x118] sm:$0xff] %v464
    %475 = vst [vmem:[#allocation2 + $0x128] sm:$0xff] %v466
    %476 = vst [vmem:[#allocation2 + $0x138] sm:$0xff] %v468
    %477 = vrot.lane.b32.xlu0 %v297, 48
    %v478 = vpop.permute.xlu0 %477
    %479 = vrot.lane.b32.xlu0 %v298, 48
    %v480 = vpop.permute.xlu0 %479
    %481 = vrot.lane.b32.xlu0 %v299, 48
    %v482 = vpop.permute.xlu0 %481
    %483 = vrot.lane.b32.xlu0 %v300, 48
    %v484 = vpop.permute.xlu0 %483
    %485 = vrot.lane.b32.xlu0 %v301, 48
    %v486 = vpop.permute.xlu0 %485
    %487 = vrot.lane.b32.xlu0 %v302, 48
    %v488 = vpop.permute.xlu0 %487
    %489 = vrot.lane.b32.xlu0 %v303, 48
    %v490 = vpop.permute.xlu0 %489
    %491 = vrot.lane.b32.xlu0 %v304, 48
    %v492 = vpop.permute.xlu0 %491
    %v493 = vrot.slane %v478, 4
    %v494 = vrot.slane %v480, 4
    %v495 = vrot.slane %v482, 4
    %v496 = vrot.slane %v484, 4
    %v497 = vrot.slane %v486, 4
    %v498 = vrot.slane %v488, 4
    %v499 = vrot.slane %v490, 4
    %v500 = vrot.slane %v492, 4
    %v501 = vsel %vm73, %v493, %v494
    %v502 = vsel %vm239, %v478, %v501
    %v503 = vsel %vm73, %v495, %v496
    %v504 = vsel %vm239, %v482, %v503
    %v505 = vsel %vm73, %v497, %v498
    %v506 = vsel %vm239, %v486, %v505
    %v507 = vsel %vm73, %v499, %v500
    %v508 = vsel %vm239, %v490, %v507
    %513 = vst [vmem:[#allocation2 + $0x148] sm:$0xff] %v502
    %514 = vst [vmem:[#allocation2 + $0x158] sm:$0xff] %v504
    %515 = vst [vmem:[#allocation2 + $0x168] sm:$0xff] %v506
    %516 = vst [vmem:[#allocation2 + $0x178] sm:$0xff] %v508
    %517 = vrot.lane.b32.xlu0 %v297, 32
    %v518 = vpop.permute.xlu0 %517
    %519 = vrot.lane.b32.xlu0 %v298, 32
    %v520 = vpop.permute.xlu0 %519
    %521 = vrot.lane.b32.xlu0 %v299, 32
    %v522 = vpop.permute.xlu0 %521
    %523 = vrot.lane.b32.xlu0 %v300, 32
    %v524 = vpop.permute.xlu0 %523
    %525 = vrot.lane.b32.xlu0 %v301, 32
    %v526 = vpop.permute.xlu0 %525
    %527 = vrot.lane.b32.xlu0 %v302, 32
    %v528 = vpop.permute.xlu0 %527
    %529 = vrot.lane.b32.xlu0 %v303, 32
    %v530 = vpop.permute.xlu0 %529
    %531 = vrot.lane.b32.xlu0 %v304, 32
    %v532 = vpop.permute.xlu0 %531
    %v533 = vrot.slane %v518, 4
    %v534 = vrot.slane %v520, 4
    %v535 = vrot.slane %v522, 4
    %v536 = vrot.slane %v524, 4
    %v537 = vrot.slane %v526, 4
    %v538 = vrot.slane %v528, 4
    %v539 = vrot.slane %v530, 4
    %v540 = vrot.slane %v532, 4
    %v541 = vsel %vm73, %v533, %v534
    %v542 = vsel %vm280, %v518, %v541
    %v543 = vsel %vm73, %v535, %v536
    %v544 = vsel %vm280, %v522, %v543
    %v545 = vsel %vm73, %v537, %v538
    %v546 = vsel %vm280, %v526, %v545
    %v547 = vsel %vm73, %v539, %v540
    %v548 = vsel %vm280, %v530, %v547
    %553 = vst [vmem:[#allocation2 + $0x188] sm:$0xff] %v542
    %554 = vst [vmem:[#allocation2 + $0x198] sm:$0xff] %v544
    %555 = vst [vmem:[#allocation2 + $0x1a8] sm:$0xff] %v546
    %556 = vst [vmem:[#allocation2 + $0x1b8] sm:$0xff] %v548
    %v557 = vld [vmem:[%s1] sm:$0xf]
    %v558 = vld [vmem:[#allocation2] sm:$0xff]
    %v559 = vld [vmem:[#allocation2 + $0x8] sm:$0xff]
    %v560 = vld [vmem:[#allocation2 + $0x10] sm:$0xff]
    %v561 = vld [vmem:[#allocation2 + $0x18] sm:$0xff]
    %v562 = vld [vmem:[#allocation2 + $0x20] sm:$0xff]
    %v563 = vld [vmem:[#allocation2 + $0x28] sm:$0xff]
    %v564 = vld [vmem:[#allocation2 + $0x30] sm:$0xff]
    %v565 = vld [vmem:[#allocation2 + $0x38] sm:$0xff]
    %v566 = vld [vmem:[#allocation2 + $0x40] sm:$0xff]
    %v567 = vld [vmem:[#allocation2 + $0x48] sm:$0xff]
    %v568 = vld [vmem:[#allocation2 + $0x50] sm:$0xff]
    %v569 = vld [vmem:[#allocation2 + $0x58] sm:$0xff]
    %v570 = vld [vmem:[#allocation2 + $0x60] sm:$0xff]
    %v571 = vld [vmem:[#allocation2 + $0x68] sm:$0xff]
    %v572 = vld [vmem:[#allocation2 + $0x70] sm:$0xff]
    %v573 = vld [vmem:[#allocation2 + $0x78] sm:$0xff]
    %v574 = vld [vmem:[#allocation2 + $0x80] sm:$0xff]
    %v575 = vld [vmem:[#allocation2 + $0x88] sm:$0xff]
    %v576 = vld [vmem:[#allocation2 + $0x90] sm:$0xff]
    %v577 = vld [vmem:[#allocation2 + $0x98] sm:$0xff]
    %v578 = vld [vmem:[#allocation2 + $0xa0] sm:$0xff]
    %v579 = vld [vmem:[#allocation2 + $0xa8] sm:$0xff]
    %v580 = vld [vmem:[#allocation2 + $0xb0] sm:$0xff]
    %v581 = vld [vmem:[#allocation2 + $0xb8] sm:$0xff]
    %v582 = vld [vmem:[#allocation2 + $0xc0] sm:$0xff]
    %v583 = vld [vmem:[#allocation2 + $0xc8] sm:$0xff]
    %v584 = vld [vmem:[#allocation2 + $0xd0] sm:$0xff]
    %v585 = vld [vmem:[#allocation2 + $0xd8] sm:$0xff]
    %v586 = vld [vmem:[#allocation2 + $0xe0] sm:$0xff]
    %v587 = vld [vmem:[#allocation2 + $0xe8] sm:$0xff]
    %v588 = vld [vmem:[#allocation2 + $0xf0] sm:$0xff]
    %v589 = vld [vmem:[#allocation2 + $0xf8] sm:$0xff]
    %v590 = vld [vmem:[#allocation2 + $0x100] sm:$0xff]
    %v591 = vld [vmem:[#allocation2 + $0x108] sm:$0xff]
    %v592 = vld [vmem:[#allocation2 + $0x110] sm:$0xff]
    %v593 = vld [vmem:[#allocation2 + $0x118] sm:$0xff]
    %v594 = vld [vmem:[#allocation2 + $0x120] sm:$0xff]
    %v595 = vld [vmem:[#allocation2 + $0x128] sm:$0xff]
    %v596 = vld [vmem:[#allocation2 + $0x130] sm:$0xff]
    %v597 = vld [vmem:[#allocation2 + $0x138] sm:$0xff]
    %v598 = vld [vmem:[#allocation2 + $0x140] sm:$0xff]
    %v599 = vld [vmem:[#allocation2 + $0x148] sm:$0xff]
    %v600 = vld [vmem:[#allocation2 + $0x150] sm:$0xff]
    %v601 = vld [vmem:[#allocation2 + $0x158] sm:$0xff]
    %v602 = vld [vmem:[#allocation2 + $0x160] sm:$0xff]
    %v603 = vld [vmem:[#allocation2 + $0x168] sm:$0xff]
    %v604 = vld [vmem:[#allocation2 + $0x170] sm:$0xff]
    %v605 = vld [vmem:[#allocation2 + $0x178] sm:$0xff]
    %v606 = vld [vmem:[#allocation2 + $0x180] sm:$0xff]
    %v607 = vld [vmem:[#allocation2 + $0x188] sm:$0xff]
    %v608 = vld [vmem:[#allocation2 + $0x190] sm:$0xff]
    %v609 = vld [vmem:[#allocation2 + $0x198] sm:$0xff]
    %v610 = vld [vmem:[#allocation2 + $0x1a0] sm:$0xff]
    %v611 = vld [vmem:[#allocation2 + $0x1a8] sm:$0xff]
    %v612 = vld [vmem:[#allocation2 + $0x1b0] sm:$0xff]
    %v613 = vld [vmem:[#allocation2 + $0x1b8] sm:$0xff]
    %v614 = vld [vmem:[%s2] sm:$0x7]
    %616 = vset.pattern.permute.xlu0 0
    %617 = vperm.xlu0 %616, %v614
    %v618 = vpop.permute.xlu0 %617
    %v622 = vunpack.c.l.s4 1983009808
    %v623 = vunpack.c.0.s8 %v622
    %v624 = vlaneseq
    %v625 = vshrl.u32 %v624, 7
    %v626 = vsub.s32 %v623, %v625
    %v627 = vrot.slane %v557, %v626
    %v628 = vcombine.high %v627, %v627
    %v686 = vunpack.c.l.b16 %v558
    %v687 = vunpack.c.h.b16 %v558
    %v688 = vunpack.c.l.b16 %v559
    %v689 = vunpack.c.h.b16 %v559
    %v690 = vunpack.c.l.b16 %v560
    %v691 = vunpack.c.h.b16 %v560
    %v692 = vunpack.c.l.b16 %v561
    %v693 = vunpack.c.h.b16 %v561
    %v694 = vunpack.c.l.b16 %v562
    %v695 = vunpack.c.h.b16 %v562
    %v696 = vunpack.c.l.b16 %v563
    %v697 = vunpack.c.h.b16 %v563
    %v698 = vunpack.c.l.b16 %v564
    %v699 = vunpack.c.h.b16 %v564
    %v700 = vunpack.c.l.b16 %v565
    %v701 = vunpack.c.h.b16 %v565
    %v702 = vunpack.c.l.b16 %v566
    %v703 = vunpack.c.h.b16 %v566
    %v704 = vunpack.c.l.b16 %v567
    %v705 = vunpack.c.h.b16 %v567
    %v706 = vunpack.c.l.b16 %v568
    %v707 = vunpack.c.h.b16 %v568
    %v708 = vunpack.c.l.b16 %v569
    %v709 = vunpack.c.h.b16 %v569
    %v710 = vunpack.c.l.b16 %v570
    %v711 = vunpack.c.h.b16 %v570
    %v712 = vunpack.c.l.b16 %v571
    %v713 = vunpack.c.h.b16 %v571
    %v714 = vunpack.c.l.b16 %v572
    %v715 = vunpack.c.h.b16 %v572
    %v716 = vunpack.c.l.b16 %v573
    %v717 = vunpack.c.h.b16 %v573
    %v718 = vunpack.c.l.b16 %v574
    %v719 = vunpack.c.h.b16 %v574
    %v720 = vunpack.c.l.b16 %v575
    %v721 = vunpack.c.h.b16 %v575
    %v722 = vunpack.c.l.b16 %v576
    %v723 = vunpack.c.h.b16 %v576
    %v724 = vunpack.c.l.b16 %v577
    %v725 = vunpack.c.h.b16 %v577
    %v726 = vunpack.c.l.b16 %v578
    %v727 = vunpack.c.h.b16 %v578
    %v728 = vunpack.c.l.b16 %v579
    %v729 = vunpack.c.h.b16 %v579
    %v730 = vunpack.c.l.b16 %v580
    %v731 = vunpack.c.h.b16 %v580
    %v732 = vunpack.c.l.b16 %v581
    %v733 = vunpack.c.h.b16 %v581
    %v734 = vunpack.c.l.b16 %v582
    %v735 = vunpack.c.h.b16 %v582
    %v736 = vunpack.c.l.b16 %v583
    %v737 = vunpack.c.h.b16 %v583
    %v738 = vunpack.c.l.b16 %v584
    %v739 = vunpack.c.h.b16 %v584
    %v740 = vunpack.c.l.b16 %v585
    %v741 = vunpack.c.h.b16 %v585
    %v742 = vunpack.c.l.b16 %v586
    %v743 = vunpack.c.h.b16 %v586
    %v744 = vunpack.c.l.b16 %v587
    %v745 = vunpack.c.h.b16 %v587
    %v746 = vunpack.c.l.b16 %v588
    %v747 = vunpack.c.h.b16 %v588
    %v748 = vunpack.c.l.b16 %v589
    %v749 = vunpack.c.h.b16 %v589
    %v750 = vunpack.c.l.b16 %v590
    %v751 = vunpack.c.h.b16 %v590
    %v752 = vunpack.c.l.b16 %v591
    %v753 = vunpack.c.h.b16 %v591
    %v754 = vunpack.c.l.b16 %v592
    %v755 = vunpack.c.h.b16 %v592
    %v756 = vunpack.c.l.b16 %v593
    %v757 = vunpack.c.h.b16 %v593
    %v758 = vunpack.c.l.b16 %v594
    %v759 = vunpack.c.h.b16 %v594
    %v760 = vunpack.c.l.b16 %v595
    %v761 = vunpack.c.h.b16 %v595
    %v762 = vunpack.c.l.b16 %v596
    %v763 = vunpack.c.h.b16 %v596
    %v764 = vunpack.c.l.b16 %v597
    %v765 = vunpack.c.h.b16 %v597
    %v766 = vunpack.c.l.b16 %v598
    %v767 = vunpack.c.h.b16 %v598
    %v768 = vunpack.c.l.b16 %v599
    %v769 = vunpack.c.h.b16 %v599
    %v770 = vunpack.c.l.b16 %v600
    %v771 = vunpack.c.h.b16 %v600
    %v772 = vunpack.c.l.b16 %v601
    %v773 = vunpack.c.h.b16 %v601
    %v774 = vunpack.c.l.b16 %v602
    %v775 = vunpack.c.h.b16 %v602
    %v776 = vunpack.c.l.b16 %v603
    %v777 = vunpack.c.h.b16 %v603
    %v778 = vunpack.c.l.b16 %v604
    %v779 = vunpack.c.h.b16 %v604
    %v780 = vunpack.c.l.b16 %v605
    %v781 = vunpack.c.h.b16 %v605
    %v782 = vunpack.c.l.b16 %v606
    %v783 = vunpack.c.h.b16 %v606
    %v784 = vunpack.c.l.b16 %v607
    %v785 = vunpack.c.h.b16 %v607
    %v786 = vunpack.c.l.b16 %v608
    %v787 = vunpack.c.h.b16 %v608
    %v788 = vunpack.c.l.b16 %v609
    %v789 = vunpack.c.h.b16 %v609
    %v790 = vunpack.c.l.b16 %v610
    %v791 = vunpack.c.h.b16 %v610
    %v792 = vunpack.c.l.b16 %v611
    %v793 = vunpack.c.h.b16 %v611
    %v794 = vunpack.c.l.b16 %v612
    %v795 = vunpack.c.h.b16 %v612
    %v796 = vunpack.c.l.b16 %v613
    %v797 = vunpack.c.h.b16 %v613
    %v798 = vpack.c.b16 %v690, %v686
    %v799 = vpack.c.b16 %v691, %v687
    %v800 = vpack.c.b16 %v692, %v688
    %v801 = vpack.c.b16 %v693, %v689
    %v802 = vpack.c.b16 %v698, %v694
    %v803 = vpack.c.b16 %v699, %v695
    %v804 = vpack.c.b16 %v700, %v696
    %v805 = vpack.c.b16 %v701, %v697
    %v806 = vpack.c.b16 %v706, %v702
    %v807 = vpack.c.b16 %v707, %v703
    %v808 = vpack.c.b16 %v708, %v704
    %v809 = vpack.c.b16 %v709, %v705
    %v810 = vpack.c.b16 %v714, %v710
    %v811 = vpack.c.b16 %v715, %v711
    %v812 = vpack.c.b16 %v716, %v712
    %v813 = vpack.c.b16 %v717, %v713
    %v814 = vpack.c.b16 %v722, %v718
    %v815 = vpack.c.b16 %v723, %v719
    %v816 = vpack.c.b16 %v724, %v720
    %v817 = vpack.c.b16 %v725, %v721
    %v818 = vpack.c.b16 %v730, %v726
    %v819 = vpack.c.b16 %v731, %v727
    %v820 = vpack.c.b16 %v732, %v728
    %v821 = vpack.c.b16 %v733, %v729
    %v822 = vpack.c.b16 %v738, %v734
    %v823 = vpack.c.b16 %v739, %v735
    %v824 = vpack.c.b16 %v740, %v736
    %v825 = vpack.c.b16 %v741, %v737
    %v826 = vpack.c.b16 %v746, %v742
    %v827 = vpack.c.b16 %v747, %v743
    %v828 = vpack.c.b16 %v748, %v744
    %v829 = vpack.c.b16 %v749, %v745
    %v830 = vpack.c.b16 %v754, %v750
    %v831 = vpack.c.b16 %v755, %v751
    %v832 = vpack.c.b16 %v756, %v752
    %v833 = vpack.c.b16 %v757, %v753
    %v834 = vpack.c.b16 %v762, %v758
    %v835 = vpack.c.b16 %v763, %v759
    %v836 = vpack.c.b16 %v764, %v760
    %v837 = vpack.c.b16 %v765, %v761
    %v838 = vpack.c.b16 %v770, %v766
    %v839 = vpack.c.b16 %v771, %v767
    %v840 = vpack.c.b16 %v772, %v768
    %v841 = vpack.c.b16 %v773, %v769
    %v842 = vpack.c.b16 %v778, %v774
    %v843 = vpack.c.b16 %v779, %v775
    %v844 = vpack.c.b16 %v780, %v776
    %v845 = vpack.c.b16 %v781, %v777
    %v846 = vpack.c.b16 %v786, %v782
    %v847 = vpack.c.b16 %v787, %v783
    %v848 = vpack.c.b16 %v788, %v784
    %v849 = vpack.c.b16 %v789, %v785
    %v850 = vpack.c.b16 %v794, %v790
    %v851 = vpack.c.b16 %v795, %v791
    %v852 = vpack.c.b16 %v796, %v792
    %v853 = vpack.c.b16 %v797, %v793
    %vm910 = vcmask 785408
    %v912 = vsel %vm910, %v628, 0
    %914 = vmatprep.subr.bf16.mxu0 %v827
    %915 = vmatpush1.bf16.msra.mxu0 %v826
    %916 = vmatprep.subr.bf16.mxu0 %v823
    %917 = vmatpush1.bf16.msra.mxu0 %v822
    %918 = vmatprep.subr.bf16.mxu0 %v819
    %919 = vmatpush1.bf16.msra.mxu0 %v818
    %920 = vmatprep.subr.bf16.mxu0 %v815
    %921 = vmatpush1.bf16.msra.mxu0 %v814
    %922 = vmatprep.subr.bf16.mxu0 %v811
    %923 = vmatpush1.bf16.msra.mxu0 %v810
    %924 = vmatprep.subr.bf16.mxu0 %v807
    %925 = vmatpush1.bf16.msra.mxu0 %v806
    %926 = vmatprep.subr.bf16.mxu0 %v803
    %927 = vmatpush1.bf16.msra.mxu0 %v802
    %928 = vmatprep.subr.bf16.mxu0 %v799
    %929 = vmatpush1.bf16.msra.mxu0 %v798
    %930 = vmatprep.subr.bf16.mxu0 0
    %931 = vmatpush2.bf16.msra.mxu0 0
    %932 = vmatprep.subr.bf16.mxu0 0
    %933 = vmatpush2.bf16.msra.mxu0 0
    %934 = vmatprep.subr.bf16.mxu0 %v851
    %935 = vmatpush2.bf16.msra.mxu0 %v850
    %936 = vmatprep.subr.bf16.mxu0 %v847
    %937 = vmatpush2.bf16.msra.mxu0 %v846
    %938 = vmatprep.subr.bf16.mxu0 %v843
    %939 = vmatpush2.bf16.msra.mxu0 %v842
    %940 = vmatprep.subr.bf16.mxu0 %v839
    %941 = vmatpush2.bf16.msra.mxu0 %v838
    %942 = vmatprep.subr.bf16.mxu0 %v835
    %943 = vmatpush2.bf16.msra.mxu0 %v834
    %944 = vmatprep.subr.bf16.mxu0 %v831
    %945 = vmatpush2.bf16.msra.mxu0 %v830
    %946 = vmatprep.mubr.bf16.mxu0 %v912
    %947 = vmatmul.mubr.bf16.gmra.mxu0 %v627
    %v948 = vpop.f32.mrf.mxu0
    %v949 = vadd.f32 %v618, %v948
    %v950 = vpop.f32.mrf.mxu0
    %v951 = vadd.f32 %v618, %v950
    %v952 = vpop.f32.mrf.mxu0
    %v953 = vpop.f32.mrf.mxu0
    %954 = vdwg.mxu0
    %955 = vmatprep.subr.bf16.mxu0 %v829
    %956 = vmatpush1.bf16.msra.mxu0 %v828
    %957 = vmatprep.subr.bf16.mxu0 %v825
    %958 = vmatpush1.bf16.msra.mxu0 %v824
    %959 = vmatprep.subr.bf16.mxu0 %v821
    %960 = vmatpush1.bf16.msra.mxu0 %v820
    %961 = vmatprep.subr.bf16.mxu0 %v817
    %962 = vmatpush1.bf16.msra.mxu0 %v816
    %963 = vmatprep.subr.bf16.mxu0 %v813
    %964 = vmatpush1.bf16.msra.mxu0 %v812
    %965 = vmatprep.subr.bf16.mxu0 %v809
    %966 = vmatpush1.bf16.msra.mxu0 %v808
    %967 = vmatprep.subr.bf16.mxu0 %v805
    %968 = vmatpush1.bf16.msra.mxu0 %v804
    %969 = vmatprep.subr.bf16.mxu0 %v801
    %970 = vmatpush1.bf16.msra.mxu0 %v800
    %971 = vmatprep.subr.bf16.mxu0 0
    %972 = vmatpush2.bf16.msra.mxu0 0
    %973 = vmatprep.subr.bf16.mxu0 0
    %974 = vmatpush2.bf16.msra.mxu0 0
    %975 = vmatprep.subr.bf16.mxu0 %v853
    %976 = vmatpush2.bf16.msra.mxu0 %v852
    %977 = vmatprep.subr.bf16.mxu0 %v849
    %978 = vmatpush2.bf16.msra.mxu0 %v848
    %979 = vmatprep.subr.bf16.mxu0 %v845
    %980 = vmatpush2.bf16.msra.mxu0 %v844
    %981 = vmatprep.subr.bf16.mxu0 %v841
    %982 = vmatpush2.bf16.msra.mxu0 %v840
    %983 = vmatprep.subr.bf16.mxu0 %v837
    %984 = vmatpush2.bf16.msra.mxu0 %v836
    %985 = vmatprep.subr.bf16.mxu0 %v833
    %986 = vmatpush2.bf16.msra.mxu0 %v832
    %987 = vmatprep.mubr.bf16.mxu0 %v912
    %988 = vmatmul.mubr.bf16.gmra.mxu0 %v627
    %v989 = vpop.f32.mrf.mxu0
    %v990 = vadd.f32 %v618, %v989
    %v991 = vpop.f32.mrf.mxu0
    %v992 = vadd.f32 %v618, %v991
    %v993 = vpop.f32.mrf.mxu0
    %v994 = vpop.f32.mrf.mxu0
    %995 = vdwg.mxu0
    %v996 = vtanh.pop %v949
    %v997 = vtanh.pop %v951
    %v998 = vtanh.pop %v990
    %v999 = vtanh.pop %v992
    %v1002 = vcombine.low %v996, %v997
    %1004 = vst [vmem:[%s3] sm:$0x77] %v1002
    %v1007 = vcombine.low %v998, %v999
    %s1009 = scalar_lea.vmem %s3, 8
    %1010 = vst [vmem:[%s1009] sm:$0x77] %v1007
    // Predicated region
    $region18: #{tpu_custom_call.1} parent=1 // pred_check
      _
    $region19: #{tpu_custom_call.1} parent=1 // pred_check_branch
      %1012 = sbr.rel (0) target = $region21
    $region20: #{tpu_custom_call.1} parent=1 // pred_region
      _
    $region21: #{tpu_custom_call.1} parent=1 // pred_fallthru
      _
    // Predicated region
    $region22: #{tpu_custom_call.1} parent=1 // pred_check
      _
    $region23: #{tpu_custom_call.1} parent=1 // pred_check_branch
      %1014 = sbr.rel (0) target = $region25
    $region24: #{tpu_custom_call.1} parent=1 // pred_region
      _
    $region25: #{tpu_custom_call.1} parent=1 // pred_fallthru
      _
    %1015 = vsyncpa [#allocation4], 1

</llo_original>
